<compile_context>
chip_gen: v6e
topology: v6e:2x2x1
jax: 0.10.0
libtpu: 0.0.40
codegen_flags: <defaults>
</compile_context>

<pallas_src>
import functools
import math

import jax
import jax.numpy as jnp
from jax.experimental import pallas as pl
from jax.experimental.pallas import tpu as pltpu

_LANE = 128          # TPU lane width; q/k/v and the dense head are padded to it
_NEG_INF = -1e30     # additive mask value (exp underflows to exactly 0)


def _fused_attention_head_kernel(t_pool,
                                 x_ref, wqkv_ref, bqkv_ref, bias_ref,
                                 wdexp_ref, tmask_ref, gmat_ref, bd_ref,
                                 out_ref):
    x = x_ref[...]                                            # (rows, n_feat)

    # --- fused Q/K/V projection: a single MXU matmul ----------------------
    qkv = jnp.dot(x, wqkv_ref[...],
                  preferred_element_type=jnp.float32) + bqkv_ref[...]
    q = qkv[:, 0 * _LANE:1 * _LANE]                           # (rows, 128)
    k = qkv[:, 1 * _LANE:2 * _LANE]
    v = qkv[:, 2 * _LANE:3 * _LANE]

    # --- attention scores; 1/sqrt(d) already folded into the Q weights ----
    scores = jax.lax.dot_general(q, k, (((1,), (1,)), ((), ())),
                                 preferred_element_type=jnp.float32)
    scores = scores + bias_ref[...]           # block-diagonal per-sample mask

    # --- numerically stable softmax over the last dim ----------------------
    m = jnp.max(scores, axis=-1, keepdims=True)
    e = jnp.exp(scores - m)
    denom = jnp.sum(e, axis=-1, keepdims=True)
    p = e * pl.reciprocal(denom, approx=True)

    att = jnp.dot(p, v, preferred_element_type=jnp.float32)   # (rows, 128)

    # --- dense head --------------------------------------------------------
    # pexp[r, t*128 + o] = att[r, :] @ wd3[t][:, o]
    pexp = jnp.dot(att, wdexp_ref[...], preferred_element_type=jnp.float32)
    pexp = pexp * tmask_ref[...]              # keep row r's own timestep block
    acc = pexp[:, 0:_LANE]                    # collapse the t_pool lane blocks
    for t in range(1, t_pool):
        acc = acc + pexp[:, t * _LANE:(t + 1) * _LANE]
    # per-sample sum of its t_pool rows, then bias
    out = jnp.dot(gmat_ref[...], acc, preferred_element_type=jnp.float32)
    out_ref[...] = out + bd_ref[...]


def eegnet_att_forward(x, params, *, n_features, n_outputs):
    B, C, F, T = x.shape
    assert C == 1 and F == n_features == 22, "SelfAttention hard-codes Linear(22,.)"

    # --- AvgPool2d((1,8), stride=(1,8), padding=(0,3)), count_include_pad=True
    t_pool = (T + 2 * 3 - 8) // 8 + 1
    assert 0 < t_pool and t_pool * 8 <= T + 6
    xp = jnp.pad(x, ((0, 0), (0, 0), (0, 0), (3, 3)))[..., :t_pool * 8]
    x_pool = xp.reshape(B, C, F, t_pool, 8).mean(axis=-1)      # divisor always 8

    # TODO(synk): Dropout(0.5) is identity in eval mode; nothing to emit.

    # torch .view(B, W_pool, C*H) on contiguous NCHW == row-major reshape
    x2 = x_pool.reshape(B, t_pool, C * F).astype(jnp.float32)

    # --- batch tiling: many samples per grid step ---------------------------
    max_rows = 256                        # cap on the (rows, rows) score tile
    if B * t_pool <= max_rows:
        bt, steps = B, 1                  # whole batch in a single grid step
    else:
        bt = max(8, ((max_rows // t_pool) // 8) * 8)   # 8-aligned blocks
        steps = -(-B // bt)
    b_pad = steps * bt
    if b_pad != B:
        x2 = jnp.concatenate(
            [x2, jnp.zeros((b_pad - B, t_pool, F), jnp.float32)], axis=0)
    x_rows = x2.reshape(b_pad * t_pool, F)
    rows = bt * t_pool                    # rows handled per grid step

    # --- parameters (torch Linear: y = x @ W^T + b) --------------------------
    scale = 1.0 / math.sqrt(float(n_features))      # fold 1/sqrt(d) into Q
    wqkv = jnp.zeros((F, 3 * _LANE), jnp.float32)
    wqkv = wqkv.at[:, 0 * _LANE:0 * _LANE + F].set(params["wq"].T * scale)
    wqkv = wqkv.at[:, 1 * _LANE:1 * _LANE + F].set(params["wk"].T)
    wqkv = wqkv.at[:, 2 * _LANE:2 * _LANE + F].set(params["wv"].T)
    bqkv = jnp.zeros((1, 3 * _LANE), jnp.float32)
    bqkv = bqkv.at[0, 0 * _LANE:0 * _LANE + F].set(params["bq"] * scale)
    bqkv = bqkv.at[0, 1 * _LANE:1 * _LANE + F].set(params["bk"])
    bqkv = bqkv.at[0, 2 * _LANE:2 * _LANE + F].set(params["bv"])

    # dense weight regrouped per pooled timestep and lane-padded:
    #   wdexp[f, t*128 + o] = dense.weight[o, t*F + f]
    wd3 = params["wd"].T.reshape(t_pool, F, n_outputs)
    wdexp = jnp.zeros((t_pool, _LANE, _LANE), jnp.float32)
    wdexp = wdexp.at[:, :F, :n_outputs].set(wd3)
    wdexp = jnp.transpose(wdexp, (1, 0, 2)).reshape(_LANE, t_pool * _LANE)
    bd_pad = jnp.zeros((1, _LANE), jnp.float32).at[0, :n_outputs].set(params["bd"])

    # --- per-step constant masks / selection matrices ------------------------
    # (constant index_maps below -> DMA'd to VMEM once, reused every step)
    r_idx = jnp.arange(rows)
    sample_of_row = r_idx // t_pool
    # additive attention bias: 0 within a sample, -1e30 across samples
    attn_bias = jnp.where(sample_of_row[:, None] == sample_of_row[None, :],
                          0.0, _NEG_INF).astype(jnp.float32)
    # multiplicative mask keeping, for row r, only its own timestep block
    col_blk = jnp.arange(t_pool * _LANE) // _LANE
    tmask = ((r_idx[:, None] % t_pool) == col_blk[None, :]).astype(jnp.float32)
    # per-sample row-sum matrix: gmat[b, r] = (r // t_pool == b)
    gmat = (sample_of_row[None, :] == jnp.arange(bt)[:, None]).astype(jnp.float32)

    kernel = functools.partial(_fused_attention_head_kernel, t_pool)
    out = pl.pallas_call(
        kernel,
        grid=(steps,),
        in_specs=[
            pl.BlockSpec((rows, F), lambda s: (s, 0)),
            pl.BlockSpec((F, 3 * _LANE), lambda s: (0, 0)),
            pl.BlockSpec((1, 3 * _LANE), lambda s: (0, 0)),
            pl.BlockSpec((rows, rows), lambda s: (0, 0)),
            pl.BlockSpec((_LANE, t_pool * _LANE), lambda s: (0, 0)),
            pl.BlockSpec((rows, t_pool * _LANE), lambda s: (0, 0)),
            pl.BlockSpec((bt, rows), lambda s: (0, 0)),
            pl.BlockSpec((1, _LANE), lambda s: (0, 0)),
        ],
        out_specs=pl.BlockSpec((bt, _LANE), lambda s: (s, 0)),
        out_shape=jax.ShapeDtypeStruct((b_pad, _LANE), jnp.float32),
        compiler_params=pltpu.CompilerParams(
            dimension_semantics=("parallel",)),
    )(x_rows, wqkv, bqkv, attn_bias, wdexp, tmask, gmat, bd_pad)
    return out[:B, :n_outputs]


def init_params(key, n_features, t_pool, n_outputs):
    ks = jax.random.split(key, 8)
    s = 0.1
    return {
        "wq": jax.random.normal(ks[0], (n_features, 22), jnp.float32) * s,
        "bq": jax.random.normal(ks[1], (n_features,), jnp.float32) * s,
        "wk": jax.random.normal(ks[2], (n_features, 22), jnp.float32) * s,
        "bk": jax.random.normal(ks[3], (n_features,), jnp.float32) * s,
        "wv": jax.random.normal(ks[4], (n_features, 22), jnp.float32) * s,
        "bv": jax.random.normal(ks[5], (n_features,), jnp.float32) * s,
        "wd": jax.random.normal(ks[6], (n_outputs, t_pool * n_features),
                                jnp.float32) * s,
        "bd": jax.random.normal(ks[7], (n_outputs,), jnp.float32) * s,
    }


def reference_forward(x, params, n_features, n_outputs):
    """Pure-JAX reference mirroring the PyTorch forward, for verification."""
    B, C, F, T = x.shape
    t_pool = (T + 6 - 8) // 8 + 1
    xp = jnp.pad(x, ((0, 0), (0, 0), (0, 0), (3, 3)))[..., : t_pool * 8]
    x_pool = xp.reshape(B, C, F, t_pool, 8).mean(axis=-1)
    x2 = x_pool.reshape(B, t_pool, C * F)
    q = x2 @ params["wq"].T + params["bq"]
    k = x2 @ params["wk"].T + params["bk"]
    v = x2 @ params["wv"].T + params["bv"]
    s = jnp.einsum("bqf,bkf->bqk", q, k) / (float(n_features) ** 0.5)
    w = jax.nn.softmax(s, axis=-1)
    att = jnp.einsum("bqk,bkf->bqf", w, v)
    return att.reshape(B, -1) @ params["wd"].T + params["bd"]


if __name__ == "__main__":
    n_features = 22      # fixed by SelfAttention's nn.Linear(22, ...)
    n_timesteps = 32
    n_outputs = 4
    batch = 2

    key = jax.random.PRNGKey(0)
    kx, kp = jax.random.split(key)
    x = jax.random.normal(kx, (batch, 1, n_features, n_timesteps), jnp.float32)

    t_pool = (n_timesteps + 6 - 8) // 8 + 1
    params = init_params(kp, n_features, t_pool, n_outputs)

    fwd = jax.jit(functools.partial(eegnet_att_forward,
                                    n_features=n_features,
                                    n_outputs=n_outputs))
    out = jax.block_until_ready(fwd(x, params))

    ref = reference_forward(x, params, n_features, n_outputs)
    assert out.shape == (batch, n_outputs)
    # tolerance covers the EUP approx-reciprocal softmax normalisation
    assert jnp.allclose(out, ref, atol=2e-3, rtol=2e-3), (
        float(jnp.max(jnp.abs(out - ref))))

    print("KERNEL_OK")
</pallas_src>

<mosaic_0001>
module attributes {stable_mosaic.version = 11 : i64} {
  func.func @_fused_attention_head_kernel(%arg0: i32, %arg1: memref<8x22xf32, #tpu.memory_space<vmem>>, %arg2: memref<22x384xf32, #tpu.memory_space<vmem>>, %arg3: memref<1x384xf32, #tpu.memory_space<vmem>>, %arg4: memref<8x8xf32, #tpu.memory_space<vmem>>, %arg5: memref<128x512xf32, #tpu.memory_space<vmem>>, %arg6: memref<8x512xf32, #tpu.memory_space<vmem>>, %arg7: memref<2x8xf32, #tpu.memory_space<vmem>>, %arg8: memref<1x128xf32, #tpu.memory_space<vmem>>, %arg9: memref<2x128xf32, #tpu.memory_space<vmem>>) attributes {dimension_semantics = [#tpu.dimension_semantics<parallel>], iteration_bounds = array<i64: 1>, scalar_prefetch = 0 : i64, scratch_operands = 0 : i64, tpu.core_type = #tpu.core_type<tc>, window_params = [{transform_indices = @transform_0, window_bounds = array<i64: 8, 22>}, {pipeline_mode = #tpu.pipeline_mode<synchronous>, transform_indices = @transform_1, window_bounds = array<i64: 22, 384>}, {pipeline_mode = #tpu.pipeline_mode<synchronous>, transform_indices = @transform_2, window_bounds = array<i64: 1, 384>}, {pipeline_mode = #tpu.pipeline_mode<synchronous>, transform_indices = @transform_3, window_bounds = array<i64: 8, 8>}, {pipeline_mode = #tpu.pipeline_mode<synchronous>, transform_indices = @transform_4, window_bounds = array<i64: 128, 512>}, {pipeline_mode = #tpu.pipeline_mode<synchronous>, transform_indices = @transform_5, window_bounds = array<i64: 8, 512>}, {pipeline_mode = #tpu.pipeline_mode<synchronous>, transform_indices = @transform_6, window_bounds = array<i64: 2, 8>}, {pipeline_mode = #tpu.pipeline_mode<synchronous>, transform_indices = @transform_7, window_bounds = array<i64: 1, 128>}, {transform_indices = @transform_8, window_bounds = array<i64: 2, 128>}]} {
    %c0 = arith.constant 0 : index
    %c0_0 = arith.constant 0 : index
    %0 = vector.load %arg1[%c0, %c0_0] : memref<8x22xf32, #tpu.memory_space<vmem>>, vector<8x22xf32>
    %c0_1 = arith.constant 0 : index
    %c0_2 = arith.constant 0 : index
    %1 = vector.load %arg2[%c0_1, %c0_2] : memref<22x384xf32, #tpu.memory_space<vmem>>, vector<22x384xf32>
    %cst = arith.constant dense<0.000000e+00> : vector<8x384xf32>
    %2 = tpu.matmul %0, %1, %cst {dimension_numbers = #tpu.dot_dimension_numbers<[1], [0], [0], [1], [0, 0, 1, 1], [], []>} : vector<8x22xf32>, vector<22x384xf32>, vector<8x384xf32> -> vector<8x384xf32>
    %c0_3 = arith.constant 0 : index
    %c0_4 = arith.constant 0 : index
    %3 = vector.load %arg3[%c0_3, %c0_4] : memref<1x384xf32, #tpu.memory_space<vmem>>, vector<1x384xf32>
    %4 = vector.broadcast %3 : vector<1x384xf32> to vector<8x384xf32>
    %5 = arith.addf %2, %4 : vector<8x384xf32>
    %6 = vector.extract_strided_slice %5 {offsets = [0, 0], sizes = [8, 128], strides = [1, 1]} : vector<8x384xf32> to vector<8x128xf32>
    %7 = vector.extract_strided_slice %5 {offsets = [0, 128], sizes = [8, 128], strides = [1, 1]} : vector<8x384xf32> to vector<8x128xf32>
    %8 = vector.extract_strided_slice %5 {offsets = [0, 256], sizes = [8, 128], strides = [1, 1]} : vector<8x384xf32> to vector<8x128xf32>
    %cst_5 = arith.constant dense<0.000000e+00> : vector<8x8xf32>
    %9 = tpu.matmul %6, %7, %cst_5 {dimension_numbers = #tpu.dot_dimension_numbers<[1], [1], [0], [0], [0, 0, 1, 0], [], []>} : vector<8x128xf32>, vector<8x128xf32>, vector<8x8xf32> -> vector<8x8xf32>
    %c0_6 = arith.constant 0 : index
    %c0_7 = arith.constant 0 : index
    %10 = vector.load %arg4[%c0_6, %c0_7] : memref<8x8xf32, #tpu.memory_space<vmem>>, vector<8x8xf32>
    %11 = arith.addf %9, %10 : vector<8x8xf32>
    %cst_8 = arith.constant dense<0xFF800000> : vector<8xf32>
    %12 = vector.multi_reduction <maximumf>, %11, %cst_8 [1] : vector<8x8xf32> to vector<8xf32>
    %13 = vector.shape_cast %12 : vector<8xf32> to vector<8x1xf32>
    %14 = vector.broadcast %13 : vector<8x1xf32> to vector<8x8xf32>
    %15 = arith.subf %11, %14 : vector<8x8xf32>
    %16 = math.exp %15 : vector<8x8xf32>
    %cst_9 = arith.constant dense<0.000000e+00> : vector<8xf32>
    %17 = vector.multi_reduction <add>, %16, %cst_9 [1] : vector<8x8xf32> to vector<8xf32>
    %18 = vector.shape_cast %17 : vector<8xf32> to vector<8x1xf32>
    %19 = tpu.reciprocal %18 {approx = true} : vector<8x1xf32> -> vector<8x1xf32>
    %20 = vector.broadcast %19 : vector<8x1xf32> to vector<8x8xf32>
    %21 = arith.mulf %16, %20 : vector<8x8xf32>
    %cst_10 = arith.constant dense<0.000000e+00> : vector<8x128xf32>
    %22 = tpu.matmul %21, %8, %cst_10 {dimension_numbers = #tpu.dot_dimension_numbers<[1], [0], [0], [1], [0, 0, 1, 1], [], []>} : vector<8x8xf32>, vector<8x128xf32>, vector<8x128xf32> -> vector<8x128xf32>
    %c0_11 = arith.constant 0 : index
    %c0_12 = arith.constant 0 : index
    %23 = vector.load %arg5[%c0_11, %c0_12] : memref<128x512xf32, #tpu.memory_space<vmem>>, vector<128x512xf32>
    %cst_13 = arith.constant dense<0.000000e+00> : vector<8x512xf32>
    %24 = tpu.matmul %22, %23, %cst_13 {dimension_numbers = #tpu.dot_dimension_numbers<[1], [0], [0], [1], [0, 0, 1, 1], [], []>} : vector<8x128xf32>, vector<128x512xf32>, vector<8x512xf32> -> vector<8x512xf32>
    %c0_14 = arith.constant 0 : index
    %c0_15 = arith.constant 0 : index
    %25 = vector.load %arg6[%c0_14, %c0_15] : memref<8x512xf32, #tpu.memory_space<vmem>>, vector<8x512xf32>
    %26 = arith.mulf %24, %25 : vector<8x512xf32>
    %27 = vector.extract_strided_slice %26 {offsets = [0, 0], sizes = [8, 128], strides = [1, 1]} : vector<8x512xf32> to vector<8x128xf32>
    %28 = vector.extract_strided_slice %26 {offsets = [0, 128], sizes = [8, 128], strides = [1, 1]} : vector<8x512xf32> to vector<8x128xf32>
    %29 = arith.addf %27, %28 : vector<8x128xf32>
    %30 = vector.extract_strided_slice %26 {offsets = [0, 256], sizes = [8, 128], strides = [1, 1]} : vector<8x512xf32> to vector<8x128xf32>
    %31 = arith.addf %29, %30 : vector<8x128xf32>
    %32 = vector.extract_strided_slice %26 {offsets = [0, 384], sizes = [8, 128], strides = [1, 1]} : vector<8x512xf32> to vector<8x128xf32>
    %33 = arith.addf %31, %32 : vector<8x128xf32>
    %c0_16 = arith.constant 0 : index
    %c0_17 = arith.constant 0 : index
    %34 = vector.load %arg7[%c0_16, %c0_17] : memref<2x8xf32, #tpu.memory_space<vmem>>, vector<2x8xf32>
    %cst_18 = arith.constant dense<0.000000e+00> : vector<2x128xf32>
    %35 = tpu.matmul %34, %33, %cst_18 {dimension_numbers = #tpu.dot_dimension_numbers<[1], [0], [0], [1], [0, 0, 1, 1], [], []>} : vector<2x8xf32>, vector<8x128xf32>, vector<2x128xf32> -> vector<2x128xf32>
    %c0_19 = arith.constant 0 : index
    %c0_20 = arith.constant 0 : index
    %36 = vector.load %arg8[%c0_19, %c0_20] : memref<1x128xf32, #tpu.memory_space<vmem>>, vector<1x128xf32>
    %37 = vector.broadcast %36 : vector<1x128xf32> to vector<2x128xf32>
    %38 = arith.addf %35, %37 : vector<2x128xf32>
    %c0_21 = arith.constant 0 : index
    %c0_22 = arith.constant 0 : index
    %39 = vector.load %arg9[%c0_21, %c0_22] : memref<2x128xf32, #tpu.memory_space<vmem>>, vector<2x128xf32>
    tpu.vector_store %arg9[%c0_21, %c0_22], %38 {strides = array<i32>} : memref<2x128xf32, #tpu.memory_space<vmem>>, vector<2x128xf32>,
    return
  }
  func.func @transform_0(%arg0: i32) -> (i32, i32) {
    %c0_i32 = arith.constant 0 : i32
    %c0_i32_0 = arith.constant 0 : i32
    return %arg0, %c0_i32 : i32, i32
  }
  func.func @transform_1(%arg0: i32) -> (i32, i32) {
    %c0_i32 = arith.constant 0 : i32
    %c0_i32_0 = arith.constant 0 : i32
    %c0_i32_1 = arith.constant 0 : i32
    return %c0_i32, %c0_i32_0 : i32, i32
  }
  func.func @transform_2(%arg0: i32) -> (i32, i32) {
    %c0_i32 = arith.constant 0 : i32
    %c0_i32_0 = arith.constant 0 : i32
    %c0_i32_1 = arith.constant 0 : i32
    return %c0_i32, %c0_i32_0 : i32, i32
  }
  func.func @transform_3(%arg0: i32) -> (i32, i32) {
    %c0_i32 = arith.constant 0 : i32
    %c0_i32_0 = arith.constant 0 : i32
    %c0_i32_1 = arith.constant 0 : i32
    return %c0_i32, %c0_i32_0 : i32, i32
  }
  func.func @transform_4(%arg0: i32) -> (i32, i32) {
    %c0_i32 = arith.constant 0 : i32
    %c0_i32_0 = arith.constant 0 : i32
    %c0_i32_1 = arith.constant 0 : i32
    return %c0_i32, %c0_i32_0 : i32, i32
  }
  func.func @transform_5(%arg0: i32) -> (i32, i32) {
    %c0_i32 = arith.constant 0 : i32
    %c0_i32_0 = arith.constant 0 : i32
    %c0_i32_1 = arith.constant 0 : i32
    return %c0_i32, %c0_i32_0 : i32, i32
  }
  func.func @transform_6(%arg0: i32) -> (i32, i32) {
    %c0_i32 = arith.constant 0 : i32
    %c0_i32_0 = arith.constant 0 : i32
    %c0_i32_1 = arith.constant 0 : i32
    return %c0_i32, %c0_i32_0 : i32, i32
  }
  func.func @transform_7(%arg0: i32) -> (i32, i32) {
    %c0_i32 = arith.constant 0 : i32
    %c0_i32_0 = arith.constant 0 : i32
    %c0_i32_1 = arith.constant 0 : i32
    return %c0_i32, %c0_i32_0 : i32, i32
  }
  func.func @transform_8(%arg0: i32) -> (i32, i32) {
    %c0_i32 = arith.constant 0 : i32
    %c0_i32_0 = arith.constant 0 : i32
    return %arg0, %c0_i32 : i32, i32
  }
}

</mosaic_0001>

<llo_original>
// kernel: eegnet_att_forward.1
$region0: #{eegnet_att_forward.1}
  #allocation0 [shape = 'u32[]', space=smem, size = 0x4, offset = 0x4, fixed_abs, tag = 'smem constant byte address 0x4 - core index']
  #allocation1 [shape = 'u32[144,128]{1,0:T(1,128)}', space=vmem, size = 0x12000, scoped, tag = 'internal scratch']
  %s0 = inlined_call_operand.vmem [shape: f32[8,22], index: 0, kind: input, shape index: {}]
  %s1 = inlined_call_operand.vmem [shape: f32[22,384], index: 1, kind: input, shape index: {}]
  %s2 = inlined_call_operand.vmem [shape: f32[1,384], index: 2, kind: input, shape index: {}]
  %s3 = inlined_call_operand.vmem [shape: f32[8,8], index: 3, kind: input, shape index: {}]
  %s4 = inlined_call_operand.vmem [shape: f32[128,512], index: 4, kind: input, shape index: {}]
  %s5 = inlined_call_operand.vmem [shape: f32[8,512], index: 5, kind: input, shape index: {}]
  %s6 = inlined_call_operand.vmem [shape: f32[2,8], index: 6, kind: input, shape index: {}]
  %s7 = inlined_call_operand.vmem [shape: f32[1,128], index: 7, kind: input, shape index: {}]
  %s8 = inlined_call_operand.hbm [shape: f32[2,128], index: 8, kind: output, shape index: {}]
  %s9 = sld [smem:[#allocation0]]
  $region42: #{eegnet_att_forward.1} parent=0
    _
  %s11 = ssub.s32 1, %s9
  %s12 = scalar_select 0, %s11, %s9
  $region1: #{eegnet_att_forward.1} parent=0
    #allocation2 [shape = 'u8[1024]{0}', space=vmem, size = 0x400, scoped, tag = 'output window, operand 0, single buffered']
    #allocation3 [shape = 's32[1]{0}', space=sflag, size = 0x4, scoped, tag = 'scoped memory for eegnet_att_forward.1']
    %13 = vsyncpa [#allocation3], 0
    // Predicated region
    $region2: #{eegnet_att_forward.1} parent=1 // pred_check
      _
    $region3: #{eegnet_att_forward.1} parent=1 // pred_check_branch
      %15 = sbr.rel (0) target = $region5
    $region4: #{eegnet_att_forward.1} parent=1 // pred_region
      _
    $region5: #{eegnet_att_forward.1} parent=1 // pred_fallthru
      _
    // Predicated region
    $region6: #{eegnet_att_forward.1} parent=1 // pred_check
      _
    $region7: #{eegnet_att_forward.1} parent=1 // pred_check_branch
      %17 = sbr.rel (0) target = $region9
    $region8: #{eegnet_att_forward.1} parent=1 // pred_region
      _
    $region9: #{eegnet_att_forward.1} parent=1 // pred_fallthru
      _
    // Predicated region
    $region10: #{eegnet_att_forward.1} parent=1 // pred_check
      _
    $region11: #{eegnet_att_forward.1} parent=1 // pred_check_branch
      %19 = sbr.rel (0) target = $region13
    $region12: #{eegnet_att_forward.1} parent=1 // pred_region
      _
    $region13: #{eegnet_att_forward.1} parent=1 // pred_fallthru
      _
    // Predicated region
    $region14: #{eegnet_att_forward.1} parent=1 // pred_check
      _
    $region15: #{eegnet_att_forward.1} parent=1 // pred_check_branch
      %21 = sbr.rel (0) target = $region17
    $region16: #{eegnet_att_forward.1} parent=1 // pred_region
      _
    $region17: #{eegnet_att_forward.1} parent=1 // pred_fallthru
      _
    // Predicated region
    $region18: #{eegnet_att_forward.1} parent=1 // pred_check
      _
    $region19: #{eegnet_att_forward.1} parent=1 // pred_check_branch
      %23 = sbr.rel (0) target = $region21
    $region20: #{eegnet_att_forward.1} parent=1 // pred_region
      _
    $region21: #{eegnet_att_forward.1} parent=1 // pred_fallthru
      _
    // Predicated region
    $region22: #{eegnet_att_forward.1} parent=1 // pred_check
      _
    $region23: #{eegnet_att_forward.1} parent=1 // pred_check_branch
      %25 = sbr.rel (0) target = $region25
    $region24: #{eegnet_att_forward.1} parent=1 // pred_region
      _
    $region25: #{eegnet_att_forward.1} parent=1 // pred_fallthru
      _
    // Predicated region
    $region26: #{eegnet_att_forward.1} parent=1 // pred_check
      _
    $region27: #{eegnet_att_forward.1} parent=1 // pred_check_branch
      %27 = sbr.rel (0) target = $region29
    $region28: #{eegnet_att_forward.1} parent=1 // pred_region
      _
    $region29: #{eegnet_att_forward.1} parent=1 // pred_fallthru
      _
    // Predicated region
    $region30: #{eegnet_att_forward.1} parent=1 // pred_check
      _
    $region31: #{eegnet_att_forward.1} parent=1 // pred_check_branch
      %29 = sbr.rel (0) target = $region33
    $region32: #{eegnet_att_forward.1} parent=1 // pred_region
      _
    $region33: #{eegnet_att_forward.1} parent=1 // pred_fallthru
      _
    %v30 = vld [vmem:[%s0] sm:$0xff]
    %v31 = vld [vmem:[%s1] sm:$0xff]
    %v32 = vld [vmem:[%s1 + $0x8] sm:$0xff]
    %v33 = vld [vmem:[%s1 + $0x10] sm:$0xff]
    %v34 = vld [vmem:[%s1 + $0x18] sm:$0xff]
    %v35 = vld [vmem:[%s1 + $0x20] sm:$0xff]
    %v36 = vld [vmem:[%s1 + $0x28] sm:$0xff]
    %v37 = vld [vmem:[%s1 + $0x30] sm:$0x3f]
    %v38 = vld [vmem:[%s1 + $0x38] sm:$0x3f]
    %v39 = vld [vmem:[%s1 + $0x40] sm:$0x3f]
    %v40 = vld [vmem:[%s2] sm:$0x7]
    %v42 = vlaneseq
    %v43 = vshrl.u32 %v42, 7
    %v44 = vsub.s32 0, %v43
    %v45 = vrot.slane %v40, %v44
    %v46 = vlaneseq
    %v47 = vshrl.u32 %v46, 7
    %v48 = vsub.s32 1, %v47
    %v49 = vrot.slane %v40, %v48
    %v50 = vlaneseq
    %v51 = vshrl.u32 %v50, 7
    %v52 = vsub.s32 2, %v51
    %v53 = vrot.slane %v40, %v52
    %vm57 = vcmask 179200
    %v59 = vsel %vm57, %v30, 0
    %vm61 = vcmask 1045504
    %v63 = vsel %vm61, %v37, 0
    %v66 = vsel %vm61, %v38, 0
    %v69 = vsel %vm61, %v39, 0
    %71 = vmatprep.subr.mxu0 0.0
    %72 = vmatpush1.msra.mxu0 0.0
    %73 = vmatprep.subr.mxu0 0.0
    %74 = vmatpush1.msra.mxu0 0.0
    %75 = vmatprep.subr.mxu0 0.0
    %76 = vmatpush1.msra.mxu0 0.0
    %77 = vmatprep.subr.mxu0 0.0
    %78 = vmatpush1.msra.mxu0 0.0
    %79 = vmatprep.subr.mxu0 0.0
    %80 = vmatpush1.msra.mxu0 0.0
    %81 = vmatprep.subr.mxu0 0.0
    %82 = vmatpush1.msra.mxu0 0.0
    %83 = vmatprep.subr.mxu0 0.0
    %84 = vmatpush1.msra.mxu0 0.0
    %85 = vmatprep.subr.mxu0 0.0
    %86 = vmatpush1.msra.mxu0 0.0
    %87 = vmatprep.subr.mxu0 0.0
    %88 = vmatpush1.msra.mxu0 0.0
    %89 = vmatprep.subr.mxu0 0.0
    %90 = vmatpush1.msra.mxu0 0.0
    %91 = vmatprep.subr.mxu0 0.0
    %92 = vmatpush1.msra.mxu0 0.0
    %93 = vmatprep.subr.mxu0 0.0
    %94 = vmatpush1.msra.mxu0 0.0
    %95 = vmatprep.subr.mxu0 0.0
    %96 = vmatpush1.msra.mxu0 0.0
    %97 = vmatprep.subr.mxu0 %v66
    %98 = vmatpush1.msra.mxu0 %v63
    %99 = vmatprep.subr.mxu0 %v35
    %100 = vmatpush1.msra.mxu0 %v34
    %101 = vmatprep.subr.mxu0 %v32
    %102 = vmatpush1.msra.mxu0 %v31
    %103 = vmatprep.subr.mxu0 0.0
    %104 = vmatpush2.msra.mxu0 0.0
    %105 = vmatprep.subr.mxu0 0.0
    %106 = vmatpush2.msra.mxu0 0.0
    %107 = vmatprep.subr.mxu0 0.0
    %108 = vmatpush2.msra.mxu0 0.0
    %109 = vmatprep.subr.mxu0 0.0
    %110 = vmatpush2.msra.mxu0 0.0
    %111 = vmatprep.subr.mxu0 0.0
    %112 = vmatpush2.msra.mxu0 0.0
    %113 = vmatprep.subr.mxu0 0.0
    %114 = vmatpush2.msra.mxu0 0.0
    %115 = vmatprep.subr.mxu0 0.0
    %116 = vmatpush2.msra.mxu0 0.0
    %117 = vmatprep.subr.mxu0 0.0
    %118 = vmatpush2.msra.mxu0 0.0
    %119 = vmatprep.subr.mxu0 0.0
    %120 = vmatpush2.msra.mxu0 0.0
    %121 = vmatprep.subr.mxu0 0.0
    %122 = vmatpush2.msra.mxu0 0.0
    %123 = vmatprep.subr.mxu0 0.0
    %124 = vmatpush2.msra.mxu0 0.0
    %125 = vmatprep.subr.mxu0 0.0
    %126 = vmatpush2.msra.mxu0 0.0
    %127 = vmatprep.subr.mxu0 0.0
    %128 = vmatpush2.msra.mxu0 0.0
    %129 = vmatprep.subr.mxu0 0.0
    %130 = vmatpush2.msra.mxu0 0.0
    %131 = vmatprep.subr.mxu0 0.0
    %132 = vmatpush2.msra.mxu0 0.0
    %133 = vmatprep.subr.mxu0 0.0
    %134 = vmatpush2.msra.mxu0 0.0
    %135 = vmatprep.mubr.f32.mxu0 0.0
    %136 = vmatmul.mubr.f32.gmra.mxu0 %v59
    %v137 = vpop.f32.mrf.mxu0
    %v138 = vadd.f32 %v45, %v137
    %v139 = vpop.f32.mrf.mxu0
    %v140 = vadd.f32 %v49, %v139
    %141 = vdwg.mxu0
    %142 = vmatprep.subr.mxu0 0.0
    %143 = vmatpush1.msra.mxu0 0.0
    %144 = vmatprep.subr.mxu0 0.0
    %145 = vmatpush1.msra.mxu0 0.0
    %146 = vmatprep.subr.mxu0 0.0
    %147 = vmatpush1.msra.mxu0 0.0
    %148 = vmatprep.subr.mxu0 0.0
    %149 = vmatpush1.msra.mxu0 0.0
    %150 = vmatprep.subr.mxu0 0.0
    %151 = vmatpush1.msra.mxu0 0.0
    %152 = vmatprep.subr.mxu0 0.0
    %153 = vmatpush1.msra.mxu0 0.0
    %154 = vmatprep.subr.mxu0 0.0
    %155 = vmatpush1.msra.mxu0 0.0
    %156 = vmatprep.subr.mxu0 0.0
    %157 = vmatpush1.msra.mxu0 0.0
    %158 = vmatprep.subr.mxu0 0.0
    %159 = vmatpush1.msra.mxu0 0.0
    %160 = vmatprep.subr.mxu0 0.0
    %161 = vmatpush1.msra.mxu0 0.0
    %162 = vmatprep.subr.mxu0 0.0
    %163 = vmatpush1.msra.mxu0 0.0
    %164 = vmatprep.subr.mxu0 0.0
    %165 = vmatpush1.msra.mxu0 0.0
    %166 = vmatprep.subr.mxu0 0.0
    %167 = vmatpush1.msra.mxu0 0.0
    %168 = vmatprep.subr.mxu0 0.0
    %169 = vmatpush1.msra.mxu0 %v69
    %170 = vmatprep.subr.mxu0 0.0
    %171 = vmatpush1.msra.mxu0 %v36
    %172 = vmatprep.subr.mxu0 0.0
    %173 = vmatpush1.msra.mxu0 %v33
    %174 = vmatprep.subr.mxu0 0.0
    %175 = vmatpush2.msra.mxu0 0.0
    %176 = vmatprep.subr.mxu0 0.0
    %177 = vmatpush2.msra.mxu0 0.0
    %178 = vmatprep.subr.mxu0 0.0
    %179 = vmatpush2.msra.mxu0 0.0
    %180 = vmatprep.subr.mxu0 0.0
    %181 = vmatpush2.msra.mxu0 0.0
    %182 = vmatprep.subr.mxu0 0.0
    %183 = vmatpush2.msra.mxu0 0.0
    %184 = vmatprep.subr.mxu0 0.0
    %185 = vmatpush2.msra.mxu0 0.0
    %186 = vmatprep.subr.mxu0 0.0
    %187 = vmatpush2.msra.mxu0 0.0
    %188 = vmatprep.subr.mxu0 0.0
    %189 = vmatpush2.msra.mxu0 0.0
    %190 = vmatprep.subr.mxu0 0.0
    %191 = vmatpush2.msra.mxu0 0.0
    %192 = vmatprep.subr.mxu0 0.0
    %193 = vmatpush2.msra.mxu0 0.0
    %194 = vmatprep.subr.mxu0 0.0
    %195 = vmatpush2.msra.mxu0 0.0
    %196 = vmatprep.subr.mxu0 0.0
    %197 = vmatpush2.msra.mxu0 0.0
    %198 = vmatprep.subr.mxu0 0.0
    %199 = vmatpush2.msra.mxu0 0.0
    %200 = vmatprep.subr.mxu0 0.0
    %201 = vmatpush2.msra.mxu0 0.0
    %202 = vmatprep.subr.mxu0 0.0
    %203 = vmatpush2.msra.mxu0 0.0
    %204 = vmatprep.subr.mxu0 0.0
    %205 = vmatpush2.msra.mxu0 0.0
    %206 = vmatprep.mubr.f32.mxu0 0.0
    %207 = vmatmul.mubr.f32.gmra.mxu0 %v59
    %v208 = vpop.f32.mrf.mxu0
    %v209 = vadd.f32 %v53, %v208
    %v210 = vpop.f32.mrf.mxu0
    %211 = vdwg.mxu0
    %v212 = vld [vmem:[%s3] sm:$0xff]
    %213 = vmatprep.subr.mxu0 0.0
    %214 = vmatpush1.xpose.msra.mxu0 0.0
    %215 = vmatprep.subr.mxu0 0.0
    %216 = vmatpush1.xpose.msra.mxu0 0.0
    %217 = vmatprep.subr.mxu0 0.0
    %218 = vmatpush1.xpose.msra.mxu0 0.0
    %219 = vmatprep.subr.mxu0 0.0
    %220 = vmatpush1.xpose.msra.mxu0 0.0
    %221 = vmatprep.subr.mxu0 0.0
    %222 = vmatpush1.xpose.msra.mxu0 0.0
    %223 = vmatprep.subr.mxu0 0.0
    %224 = vmatpush1.xpose.msra.mxu0 0.0
    %225 = vmatprep.subr.mxu0 0.0
    %226 = vmatpush1.xpose.msra.mxu0 0.0
    %227 = vmatprep.subr.mxu0 0.0
    %228 = vmatpush1.xpose.msra.mxu0 0.0
    %229 = vmatprep.subr.mxu0 0.0
    %230 = vmatpush1.xpose.msra.mxu0 0.0
    %231 = vmatprep.subr.mxu0 0.0
    %232 = vmatpush1.xpose.msra.mxu0 0.0
    %233 = vmatprep.subr.mxu0 0.0
    %234 = vmatpush1.xpose.msra.mxu0 0.0
    %235 = vmatprep.subr.mxu0 0.0
    %236 = vmatpush1.xpose.msra.mxu0 0.0
    %237 = vmatprep.subr.mxu0 0.0
    %238 = vmatpush1.xpose.msra.mxu0 0.0
    %239 = vmatprep.subr.mxu0 0.0
    %240 = vmatpush1.xpose.msra.mxu0 0.0
    %241 = vmatprep.subr.mxu0 0.0
    %242 = vmatpush1.xpose.msra.mxu0 0.0
    %243 = vmatprep.subr.mxu0 0.0
    %244 = vmatpush1.xpose.msra.mxu0 %v140
    %245 = vmatprep.subr.mxu0 0.0
    %246 = vmatpush2.xpose.msra.mxu0 0.0
    %247 = vmatprep.subr.mxu0 0.0
    %248 = vmatpush2.xpose.msra.mxu0 0.0
    %249 = vmatprep.subr.mxu0 0.0
    %250 = vmatpush2.xpose.msra.mxu0 0.0
    %251 = vmatprep.subr.mxu0 0.0
    %252 = vmatpush2.xpose.msra.mxu0 0.0
    %253 = vmatprep.subr.mxu0 0.0
    %254 = vmatpush2.xpose.msra.mxu0 0.0
    %255 = vmatprep.subr.mxu0 0.0
    %256 = vmatpush2.xpose.msra.mxu0 0.0
    %257 = vmatprep.subr.mxu0 0.0
    %258 = vmatpush2.xpose.msra.mxu0 0.0
    %259 = vmatprep.subr.mxu0 0.0
    %260 = vmatpush2.xpose.msra.mxu0 0.0
    %261 = vmatprep.subr.mxu0 0.0
    %262 = vmatpush2.xpose.msra.mxu0 0.0
    %263 = vmatprep.subr.mxu0 0.0
    %264 = vmatpush2.xpose.msra.mxu0 0.0
    %265 = vmatprep.subr.mxu0 0.0
    %266 = vmatpush2.xpose.msra.mxu0 0.0
    %267 = vmatprep.subr.mxu0 0.0
    %268 = vmatpush2.xpose.msra.mxu0 0.0
    %269 = vmatprep.subr.mxu0 0.0
    %270 = vmatpush2.xpose.msra.mxu0 0.0
    %271 = vmatprep.subr.mxu0 0.0
    %272 = vmatpush2.xpose.msra.mxu0 0.0
    %273 = vmatprep.subr.mxu0 0.0
    %274 = vmatpush2.xpose.msra.mxu0 0.0
    %275 = vmatprep.subr.mxu0 0.0
    %276 = vmatpush2.xpose.msra.mxu0 0.0
    %277 = vmatprep.mubr.f32.mxu0 0.0
    %278 = vmatmul.mubr.f32.gmra.mxu0 %v138
    %v279 = vpop.f32.mrf.mxu0
    %v280 = vadd.f32 %v212, %v279
    %v281 = vpop.f32.mrf.mxu0
    %282 = vdwg.mxu0
    %vm283 = vcmask 64512
    %v284 = vsel %vm283, %v280, -inf
    %285 = vmax.xlane.f32.xlu0 %v284
    %v286 = vpop.xlane.xlu0 %285
    %v287 = vsub.f32 %v280, %v286
    %v288 = vmul.f32 %v287, 1.442695
    %v289 = vpow.pop %v288
    %v290 = vsel %vm283, %v289, 0.0
    %291 = vadd.xlane.f32.xlu0 %v290
    %v292 = vpop.xlane.xlu0 %291
    %v293 = vrcp.pop %v292
    %v294 = vmul.f32 %v289, %v293
    %v296 = vsel %vm283, %v294, 0
    %298 = vmatprep.subr.mxu0 0.0
    %299 = vmatpush1.msra.mxu0 0.0
    %300 = vmatprep.subr.mxu0 0.0
    %301 = vmatpush1.msra.mxu0 0.0
    %302 = vmatprep.subr.mxu0 0.0
    %303 = vmatpush1.msra.mxu0 0.0
    %304 = vmatprep.subr.mxu0 0.0
    %305 = vmatpush1.msra.mxu0 0.0
    %306 = vmatprep.subr.mxu0 0.0
    %307 = vmatpush1.msra.mxu0 0.0
    %308 = vmatprep.subr.mxu0 0.0
    %309 = vmatpush1.msra.mxu0 0.0
    %310 = vmatprep.subr.mxu0 0.0
    %311 = vmatpush1.msra.mxu0 0.0
    %312 = vmatprep.subr.mxu0 0.0
    %313 = vmatpush1.msra.mxu0 0.0
    %314 = vmatprep.subr.mxu0 0.0
    %315 = vmatpush1.msra.mxu0 0.0
    %316 = vmatprep.subr.mxu0 0.0
    %317 = vmatpush1.msra.mxu0 0.0
    %318 = vmatprep.subr.mxu0 0.0
    %319 = vmatpush1.msra.mxu0 0.0
    %320 = vmatprep.subr.mxu0 0.0
    %321 = vmatpush1.msra.mxu0 0.0
    %322 = vmatprep.subr.mxu0 0.0
    %323 = vmatpush1.msra.mxu0 0.0
    %324 = vmatprep.subr.mxu0 0.0
    %325 = vmatpush1.msra.mxu0 0.0
    %326 = vmatprep.subr.mxu0 0.0
    %327 = vmatpush1.msra.mxu0 0.0
    %328 = vmatprep.subr.mxu0 0.0
    %329 = vmatpush1.msra.mxu0 %v209
    %330 = vmatprep.subr.mxu0 0.0
    %331 = vmatpush2.msra.mxu0 0.0
    %332 = vmatprep.subr.mxu0 0.0
    %333 = vmatpush2.msra.mxu0 0.0
    %334 = vmatprep.subr.mxu0 0.0
    %335 = vmatpush2.msra.mxu0 0.0
    %336 = vmatprep.subr.mxu0 0.0
    %337 = vmatpush2.msra.mxu0 0.0
    %338 = vmatprep.subr.mxu0 0.0
    %339 = vmatpush2.msra.mxu0 0.0
    %340 = vmatprep.subr.mxu0 0.0
    %341 = vmatpush2.msra.mxu0 0.0
    %342 = vmatprep.subr.mxu0 0.0
    %343 = vmatpush2.msra.mxu0 0.0
    %344 = vmatprep.subr.mxu0 0.0
    %345 = vmatpush2.msra.mxu0 0.0
    %346 = vmatprep.subr.mxu0 0.0
    %347 = vmatpush2.msra.mxu0 0.0
    %348 = vmatprep.subr.mxu0 0.0
    %349 = vmatpush2.msra.mxu0 0.0
    %350 = vmatprep.subr.mxu0 0.0
    %351 = vmatpush2.msra.mxu0 0.0
    %352 = vmatprep.subr.mxu0 0.0
    %353 = vmatpush2.msra.mxu0 0.0
    %354 = vmatprep.subr.mxu0 0.0
    %355 = vmatpush2.msra.mxu0 0.0
    %356 = vmatprep.subr.mxu0 0.0
    %357 = vmatpush2.msra.mxu0 0.0
    %358 = vmatprep.subr.mxu0 0.0
    %359 = vmatpush2.msra.mxu0 0.0
    %360 = vmatprep.subr.mxu0 0.0
    %361 = vmatpush2.msra.mxu0 0.0
    %362 = vmatprep.mubr.f32.mxu0 0.0
    %363 = vmatmul.mubr.f32.gmra.mxu0 %v296
    %v364 = vpop.f32.mrf.mxu0
    %v365 = vadd.f32 0.0, %v364
    %v366 = vpop.f32.mrf.mxu0
    %367 = vdwg.mxu0
    %v368 = vld [vmem:[%s4] sm:$0xff]
    %v369 = vld [vmem:[%s4 + $0x8] sm:$0xff]
    %v370 = vld [vmem:[%s4 + $0x10] sm:$0xff]
    %v371 = vld [vmem:[%s4 + $0x18] sm:$0xff]
    %v372 = vld [vmem:[%s4 + $0x20] sm:$0xff]
    %v373 = vld [vmem:[%s4 + $0x28] sm:$0xff]
    %v374 = vld [vmem:[%s4 + $0x30] sm:$0xff]
    %v375 = vld [vmem:[%s4 + $0x38] sm:$0xff]
    %v376 = vld [vmem:[%s4 + $0x40] sm:$0xff]
    %v377 = vld [vmem:[%s4 + $0x48] sm:$0xff]
    %v378 = vld [vmem:[%s4 + $0x50] sm:$0xff]
    %v379 = vld [vmem:[%s4 + $0x58] sm:$0xff]
    %v380 = vld [vmem:[%s4 + $0x60] sm:$0xff]
    %v381 = vld [vmem:[%s4 + $0x68] sm:$0xff]
    %v382 = vld [vmem:[%s4 + $0x70] sm:$0xff]
    %v383 = vld [vmem:[%s4 + $0x78] sm:$0xff]
    %v384 = vld [vmem:[%s4 + $0x80] sm:$0xff]
    %v385 = vld [vmem:[%s4 + $0x88] sm:$0xff]
    %v386 = vld [vmem:[%s4 + $0x90] sm:$0xff]
    %v387 = vld [vmem:[%s4 + $0x98] sm:$0xff]
    %v388 = vld [vmem:[%s4 + $0xa0] sm:$0xff]
    %v389 = vld [vmem:[%s4 + $0xa8] sm:$0xff]
    %v390 = vld [vmem:[%s4 + $0xb0] sm:$0xff]
    %v391 = vld [vmem:[%s4 + $0xb8] sm:$0xff]
    %v392 = vld [vmem:[%s4 + $0xc0] sm:$0xff]
    %v393 = vld [vmem:[%s4 + $0xc8] sm:$0xff]
    %v394 = vld [vmem:[%s4 + $0xd0] sm:$0xff]
    %v395 = vld [vmem:[%s4 + $0xd8] sm:$0xff]
    %v396 = vld [vmem:[%s4 + $0xe0] sm:$0xff]
    %v397 = vld [vmem:[%s4 + $0xe8] sm:$0xff]
    %v398 = vld [vmem:[%s4 + $0xf0] sm:$0xff]
    %v399 = vld [vmem:[%s4 + $0xf8] sm:$0xff]
    %v400 = vld [vmem:[%s4 + $0x100] sm:$0xff]
    %v401 = vld [vmem:[%s4 + $0x108] sm:$0xff]
    %v402 = vld [vmem:[%s4 + $0x110] sm:$0xff]
    %v403 = vld [vmem:[%s4 + $0x118] sm:$0xff]
    %v404 = vld [vmem:[%s4 + $0x120] sm:$0xff]
    %v405 = vld [vmem:[%s4 + $0x128] sm:$0xff]
    %v406 = vld [vmem:[%s4 + $0x130] sm:$0xff]
    %v407 = vld [vmem:[%s4 + $0x138] sm:$0xff]
    %v408 = vld [vmem:[%s4 + $0x140] sm:$0xff]
    %v409 = vld [vmem:[%s4 + $0x148] sm:$0xff]
    %v410 = vld [vmem:[%s4 + $0x150] sm:$0xff]
    %v411 = vld [vmem:[%s4 + $0x158] sm:$0xff]
    %v412 = vld [vmem:[%s4 + $0x160] sm:$0xff]
    %v413 = vld [vmem:[%s4 + $0x168] sm:$0xff]
    %v414 = vld [vmem:[%s4 + $0x170] sm:$0xff]
    %v415 = vld [vmem:[%s4 + $0x178] sm:$0xff]
    %v416 = vld [vmem:[%s4 + $0x180] sm:$0xff]
    %v417 = vld [vmem:[%s4 + $0x188] sm:$0xff]
    %v418 = vld [vmem:[%s4 + $0x190] sm:$0xff]
    %v419 = vld [vmem:[%s4 + $0x198] sm:$0xff]
    %v420 = vld [vmem:[%s4 + $0x1a0] sm:$0xff]
    %v421 = vld [vmem:[%s4 + $0x1a8] sm:$0xff]
    %v422 = vld [vmem:[%s4 + $0x1b0] sm:$0xff]
    %v423 = vld [vmem:[%s4 + $0x1b8] sm:$0xff]
    %v424 = vld [vmem:[%s4 + $0x1c0] sm:$0xff]
    %v425 = vld [vmem:[%s4 + $0x1c8] sm:$0xff]
    %v426 = vld [vmem:[%s4 + $0x1d0] sm:$0xff]
    %v427 = vld [vmem:[%s4 + $0x1d8] sm:$0xff]
    %v428 = vld [vmem:[%s4 + $0x1e0] sm:$0xff]
    %v429 = vld [vmem:[%s4 + $0x1e8] sm:$0xff]
    %v430 = vld [vmem:[%s4 + $0x1f0] sm:$0xff]
    %v431 = vld [vmem:[%s4 + $0x1f8] sm:$0xff]
    %432 = vmatprep.subr.mxu0 %v429
    %433 = vmatpush1.msra.mxu0 %v428
    %434 = vmatprep.subr.mxu0 %v425
    %435 = vmatpush1.msra.mxu0 %v424
    %436 = vmatprep.subr.mxu0 %v421
    %437 = vmatpush1.msra.mxu0 %v420
    %438 = vmatprep.subr.mxu0 %v417
    %439 = vmatpush1.msra.mxu0 %v416
    %440 = vmatprep.subr.mxu0 %v413
    %441 = vmatpush1.msra.mxu0 %v412
    %442 = vmatprep.subr.mxu0 %v409
    %443 = vmatpush1.msra.mxu0 %v408
    %444 = vmatprep.subr.mxu0 %v405
    %445 = vmatpush1.msra.mxu0 %v404
    %446 = vmatprep.subr.mxu0 %v401
    %447 = vmatpush1.msra.mxu0 %v400
    %448 = vmatprep.subr.mxu0 %v397
    %449 = vmatpush1.msra.mxu0 %v396
    %450 = vmatprep.subr.mxu0 %v393
    %451 = vmatpush1.msra.mxu0 %v392
    %452 = vmatprep.subr.mxu0 %v389
    %453 = vmatpush1.msra.mxu0 %v388
    %454 = vmatprep.subr.mxu0 %v385
    %455 = vmatpush1.msra.mxu0 %v384
    %456 = vmatprep.subr.mxu0 %v381
    %457 = vmatpush1.msra.mxu0 %v380
    %458 = vmatprep.subr.mxu0 %v377
    %459 = vmatpush1.msra.mxu0 %v376
    %460 = vmatprep.subr.mxu0 %v373
    %461 = vmatpush1.msra.mxu0 %v372
    %462 = vmatprep.subr.mxu0 %v369
    %463 = vmatpush1.msra.mxu0 %v368
    %464 = vmatprep.subr.mxu0 0.0
    %465 = vmatpush2.msra.mxu0 0.0
    %466 = vmatprep.subr.mxu0 0.0
    %467 = vmatpush2.msra.mxu0 0.0
    %468 = vmatprep.subr.mxu0 0.0
    %469 = vmatpush2.msra.mxu0 0.0
    %470 = vmatprep.subr.mxu0 0.0
    %471 = vmatpush2.msra.mxu0 0.0
    %472 = vmatprep.subr.mxu0 0.0
    %473 = vmatpush2.msra.mxu0 0.0
    %474 = vmatprep.subr.mxu0 0.0
    %475 = vmatpush2.msra.mxu0 0.0
    %476 = vmatprep.subr.mxu0 0.0
    %477 = vmatpush2.msra.mxu0 0.0
    %478 = vmatprep.subr.mxu0 0.0
    %479 = vmatpush2.msra.mxu0 0.0
    %480 = vmatprep.subr.mxu0 0.0
    %481 = vmatpush2.msra.mxu0 0.0
    %482 = vmatprep.subr.mxu0 0.0
    %483 = vmatpush2.msra.mxu0 0.0
    %484 = vmatprep.subr.mxu0 0.0
    %485 = vmatpush2.msra.mxu0 0.0
    %486 = vmatprep.subr.mxu0 0.0
    %487 = vmatpush2.msra.mxu0 0.0
    %488 = vmatprep.subr.mxu0 0.0
    %489 = vmatpush2.msra.mxu0 0.0
    %490 = vmatprep.subr.mxu0 0.0
    %491 = vmatpush2.msra.mxu0 0.0
    %492 = vmatprep.subr.mxu0 0.0
    %493 = vmatpush2.msra.mxu0 0.0
    %494 = vmatprep.subr.mxu0 0.0
    %495 = vmatpush2.msra.mxu0 0.0
    %496 = vmatprep.mubr.f32.mxu0 0.0
    %497 = vmatmul.mubr.f32.gmra.mxu0 %v365
    %v498 = vpop.f32.mrf.mxu0
    %v499 = vadd.f32 0.0, %v498
    %v500 = vpop.f32.mrf.mxu0
    %v501 = vadd.f32 0.0, %v500
    %502 = vdwg.mxu0
    %503 = vmatprep.subr.mxu0 %v431
    %504 = vmatpush1.msra.mxu0 %v430
    %505 = vmatprep.subr.mxu0 %v427
    %506 = vmatpush1.msra.mxu0 %v426
    %507 = vmatprep.subr.mxu0 %v423
    %508 = vmatpush1.msra.mxu0 %v422
    %509 = vmatprep.subr.mxu0 %v419
    %510 = vmatpush1.msra.mxu0 %v418
    %511 = vmatprep.subr.mxu0 %v415
    %512 = vmatpush1.msra.mxu0 %v414
    %513 = vmatprep.subr.mxu0 %v411
    %514 = vmatpush1.msra.mxu0 %v410
    %515 = vmatprep.subr.mxu0 %v407
    %516 = vmatpush1.msra.mxu0 %v406
    %517 = vmatprep.subr.mxu0 %v403
    %518 = vmatpush1.msra.mxu0 %v402
    %519 = vmatprep.subr.mxu0 %v399
    %520 = vmatpush1.msra.mxu0 %v398
    %521 = vmatprep.subr.mxu0 %v395
    %522 = vmatpush1.msra.mxu0 %v394
    %523 = vmatprep.subr.mxu0 %v391
    %524 = vmatpush1.msra.mxu0 %v390
    %525 = vmatprep.subr.mxu0 %v387
    %526 = vmatpush1.msra.mxu0 %v386
    %527 = vmatprep.subr.mxu0 %v383
    %528 = vmatpush1.msra.mxu0 %v382
    %529 = vmatprep.subr.mxu0 %v379
    %530 = vmatpush1.msra.mxu0 %v378
    %531 = vmatprep.subr.mxu0 %v375
    %532 = vmatpush1.msra.mxu0 %v374
    %533 = vmatprep.subr.mxu0 %v371
    %534 = vmatpush1.msra.mxu0 %v370
    %535 = vmatprep.subr.mxu0 0.0
    %536 = vmatpush2.msra.mxu0 0.0
    %537 = vmatprep.subr.mxu0 0.0
    %538 = vmatpush2.msra.mxu0 0.0
    %539 = vmatprep.subr.mxu0 0.0
    %540 = vmatpush2.msra.mxu0 0.0
    %541 = vmatprep.subr.mxu0 0.0
    %542 = vmatpush2.msra.mxu0 0.0
    %543 = vmatprep.subr.mxu0 0.0
    %544 = vmatpush2.msra.mxu0 0.0
    %545 = vmatprep.subr.mxu0 0.0
    %546 = vmatpush2.msra.mxu0 0.0
    %547 = vmatprep.subr.mxu0 0.0
    %548 = vmatpush2.msra.mxu0 0.0
    %549 = vmatprep.subr.mxu0 0.0
    %550 = vmatpush2.msra.mxu0 0.0
    %551 = vmatprep.subr.mxu0 0.0
    %552 = vmatpush2.msra.mxu0 0.0
    %553 = vmatprep.subr.mxu0 0.0
    %554 = vmatpush2.msra.mxu0 0.0
    %555 = vmatprep.subr.mxu0 0.0
    %556 = vmatpush2.msra.mxu0 0.0
    %557 = vmatprep.subr.mxu0 0.0
    %558 = vmatpush2.msra.mxu0 0.0
    %559 = vmatprep.subr.mxu0 0.0
    %560 = vmatpush2.msra.mxu0 0.0
    %561 = vmatprep.subr.mxu0 0.0
    %562 = vmatpush2.msra.mxu0 0.0
    %563 = vmatprep.subr.mxu0 0.0
    %564 = vmatpush2.msra.mxu0 0.0
    %565 = vmatprep.subr.mxu0 0.0
    %566 = vmatpush2.msra.mxu0 0.0
    %567 = vmatprep.mubr.f32.mxu0 0.0
    %568 = vmatmul.mubr.f32.gmra.mxu0 %v365
    %v569 = vpop.f32.mrf.mxu0
    %v570 = vadd.f32 0.0, %v569
    %v571 = vpop.f32.mrf.mxu0
    %v572 = vadd.f32 0.0, %v571
    %573 = vdwg.mxu0
    %v574 = vld [vmem:[%s5] sm:$0xff]
    %v575 = vld [vmem:[%s5 + $0x8] sm:$0xff]
    %v576 = vld [vmem:[%s5 + $0x10] sm:$0xff]
    %v577 = vld [vmem:[%s5 + $0x18] sm:$0xff]
    %v578 = vmul.f32 %v499, %v574
    %v579 = vmul.f32 %v501, %v575
    %v580 = vmul.f32 %v570, %v576
    %v581 = vmul.f32 %v572, %v577
    %v582 = vadd.f32 %v578, %v579
    %v583 = vadd.f32 %v582, %v580
    %v584 = vadd.f32 %v583, %v581
    %v585 = vld [vmem:[%s6] sm:$0x3]
    %v586 = vld [vmem:[%s7] sm:$0x1]
    %v588 = vlaneseq
    %v589 = vshrl.u32 %v588, 7
    %v590 = vsub.s32 0, %v589
    %v591 = vrot.slane %v586, %v590
    %v594 = vsel %vm283, %v585, 0
    %596 = vmatprep.subr.mxu0 0.0
    %597 = vmatpush1.msra.mxu0 0.0
    %598 = vmatprep.subr.mxu0 0.0
    %599 = vmatpush1.msra.mxu0 0.0
    %600 = vmatprep.subr.mxu0 0.0
    %601 = vmatpush1.msra.mxu0 0.0
    %602 = vmatprep.subr.mxu0 0.0
    %603 = vmatpush1.msra.mxu0 0.0
    %604 = vmatprep.subr.mxu0 0.0
    %605 = vmatpush1.msra.mxu0 0.0
    %606 = vmatprep.subr.mxu0 0.0
    %607 = vmatpush1.msra.mxu0 0.0
    %608 = vmatprep.subr.mxu0 0.0
    %609 = vmatpush1.msra.mxu0 0.0
    %610 = vmatprep.subr.mxu0 0.0
    %611 = vmatpush1.msra.mxu0 0.0
    %612 = vmatprep.subr.mxu0 0.0
    %613 = vmatpush1.msra.mxu0 0.0
    %614 = vmatprep.subr.mxu0 0.0
    %615 = vmatpush1.msra.mxu0 0.0
    %616 = vmatprep.subr.mxu0 0.0
    %617 = vmatpush1.msra.mxu0 0.0
    %618 = vmatprep.subr.mxu0 0.0
    %619 = vmatpush1.msra.mxu0 0.0
    %620 = vmatprep.subr.mxu0 0.0
    %621 = vmatpush1.msra.mxu0 0.0
    %622 = vmatprep.subr.mxu0 0.0
    %623 = vmatpush1.msra.mxu0 0.0
    %624 = vmatprep.subr.mxu0 0.0
    %625 = vmatpush1.msra.mxu0 0.0
    %626 = vmatprep.subr.mxu0 0.0
    %627 = vmatpush1.msra.mxu0 %v584
    %628 = vmatprep.subr.mxu0 0.0
    %629 = vmatpush2.msra.mxu0 0.0
    %630 = vmatprep.subr.mxu0 0.0
    %631 = vmatpush2.msra.mxu0 0.0
    %632 = vmatprep.subr.mxu0 0.0
    %633 = vmatpush2.msra.mxu0 0.0
    %634 = vmatprep.subr.mxu0 0.0
    %635 = vmatpush2.msra.mxu0 0.0
    %636 = vmatprep.subr.mxu0 0.0
    %637 = vmatpush2.msra.mxu0 0.0
    %638 = vmatprep.subr.mxu0 0.0
    %639 = vmatpush2.msra.mxu0 0.0
    %640 = vmatprep.subr.mxu0 0.0
    %641 = vmatpush2.msra.mxu0 0.0
    %642 = vmatprep.subr.mxu0 0.0
    %643 = vmatpush2.msra.mxu0 0.0
    %644 = vmatprep.subr.mxu0 0.0
    %645 = vmatpush2.msra.mxu0 0.0
    %646 = vmatprep.subr.mxu0 0.0
    %647 = vmatpush2.msra.mxu0 0.0
    %648 = vmatprep.subr.mxu0 0.0
    %649 = vmatpush2.msra.mxu0 0.0
    %650 = vmatprep.subr.mxu0 0.0
    %651 = vmatpush2.msra.mxu0 0.0
    %652 = vmatprep.subr.mxu0 0.0
    %653 = vmatpush2.msra.mxu0 0.0
    %654 = vmatprep.subr.mxu0 0.0
    %655 = vmatpush2.msra.mxu0 0.0
    %656 = vmatprep.subr.mxu0 0.0
    %657 = vmatpush2.msra.mxu0 0.0
    %658 = vmatprep.subr.mxu0 0.0
    %659 = vmatpush2.msra.mxu0 0.0
    %660 = vmatprep.mubr.f32.mxu0 0.0
    %661 = vmatmul.mubr.f32.gmra.mxu0 %v594
    %v662 = vpop.f32.mrf.mxu0
    %v663 = vadd.f32 %v591, %v662
    %v664 = vpop.f32.mrf.mxu0
    %665 = vdwg.mxu0
    %666 = vst [vmem:[#allocation2] sm:$0x3] %v663
    // Predicated region
    $region34: #{eegnet_att_forward.1} parent=1 // pred_check
      _
    $region35: #{eegnet_att_forward.1} parent=1 // pred_check_branch
      %668 = sbr.rel (0) target = $region37
    $region36: #{eegnet_att_forward.1} parent=1 // pred_region
      %s670 = ssub.s32 32, 32
      %671 = vsyncadd [#allocation3], %s670
      %s673 = sshll.u32 [#allocation2], 4
      %s674 = int_to_ptr.vmem [resolvable:$true] %s673
      %676 = dma.vmem_to_hbm [thread:$0]  %s674, 32, %s8, [#allocation3]
    $region37: #{eegnet_att_forward.1} parent=1 // pred_fallthru
      _
    // Predicated region
    $region38: #{eegnet_att_forward.1} parent=1 // pred_check
      _
    $region39: #{eegnet_att_forward.1} parent=1 // pred_check_branch
      %678 = sbr.rel (0) target = $region41
    $region40: #{eegnet_att_forward.1} parent=1 // pred_region
      %679 = dma.done [#allocation3], 32
    $region41: #{eegnet_att_forward.1} parent=1 // pred_fallthru
      _
    %680 = vsyncpa [#allocation3], 1

</llo_original>
